<compile_context>
chip_gen: v7x
topology: tpu7x:2x2x1
jax: 0.10.0
libtpu: 0.0.40
codegen_flags: <defaults>
</compile_context>

<pallas_src>
import jax
import jax.numpy as jnp
from jax.experimental import pallas as pl
from jax.experimental.pallas import tpu as pltpu


# ---------------------------------------------------------------------------
# Kernel
# ---------------------------------------------------------------------------
def branch_critic_kernel(obs_ref, act_ref,
                         wt_obs_ref, wt_act_ref,
                         w12a_ref, w12b_ref,
                         slab_ref,
                         out_ref):
    H = wt_obs_ref.shape[1]          # hidden_dim   (static)
    R2 = out_ref.shape[1]            # 2 * reward_channels (static)

    # packed per-feature vectors: one (8, 2H) slab, sliced statically
    bt   = slab_ref[0:1, 0:H]        # (1, H)  trunk bias
    ln_g = slab_ref[1:2, 0:H]        # (1, H)  LayerNorm gamma
    ln_b = slab_ref[2:3, 0:H]        # (1, H)  LayerNorm beta
    b12a = slab_ref[3:4, :]          # (1, 2H) fused head-1/head-2 first bias
    b12b = slab_ref[4:5, 0:R2]       # (1, 2R) fused head-1/head-2 second bias

    # ---- trunk: (split) Linear -> LayerNorm -> Tanh ----
    h = (jnp.dot(obs_ref[...], wt_obs_ref[...], preferred_element_type=jnp.float32)
         + jnp.dot(act_ref[...], wt_act_ref[...], preferred_element_type=jnp.float32)
         + bt)
    mean = jnp.mean(h, axis=-1, keepdims=True)
    c = h - mean
    var = jnp.mean(c * c, axis=-1, keepdims=True)
    h = c * jax.lax.rsqrt(var + 1e-5)            # PyTorch LayerNorm eps = 1e-5
    h = jnp.tanh(h * ln_g + ln_b)

    # ---- both heads, first Linear + ReLU fused: (B, H) @ (H, 2H) ----
    h12 = jnp.dot(h, w12a_ref[...], preferred_element_type=jnp.float32) + b12a
    h12 = jnp.maximum(h12, 0.0)

    # ---- both heads, second Linear fused (block-diag, column-interleaved) ----
    # column 2j <- head1 channel j, column 2j+1 <- head2 channel j, so
    # out.reshape(B, R, 2) == stack([q1, q2], -1) with zero extra glue.
    out_ref[...] = (jnp.dot(h12, w12b_ref[...], preferred_element_type=jnp.float32)
                    + b12b)


# ---------------------------------------------------------------------------
# Wrapper
# ---------------------------------------------------------------------------
def branch_critic_forward(obs, action, prepared, *, batch_tile=256):
    obs = obs.astype(jnp.float32)
    action = action.astype(jnp.float32)

    B, obs_dim = obs.shape
    act_dim = action.shape[1]
    H = prepared["wt_obs"].shape[1]
    R2 = prepared["w12b"].shape[1]
    R = R2 // 2

    TB = min(B, batch_tile)
    grid = (pl.cdiv(B, TB),)

    batch_map = lambda i: (i, 0)     # x / out tiled over batch
    const_map = lambda i: (0, 0)     # weights stay VMEM-resident across steps

    q12 = pl.pallas_call(
        branch_critic_kernel,
        out_shape=jax.ShapeDtypeStruct((B, R2), jnp.float32),
        grid_spec=pltpu.PrefetchScalarGridSpec(
            num_scalar_prefetch=0,
            grid=grid,
            in_specs=[
                pl.BlockSpec((TB, obs_dim), batch_map),
                pl.BlockSpec((TB, act_dim), batch_map),
                pl.BlockSpec((obs_dim, H), const_map),
                pl.BlockSpec((act_dim, H), const_map),
                pl.BlockSpec((H, 2 * H), const_map),
                pl.BlockSpec((2 * H, R2), const_map),
                pl.BlockSpec((8, 2 * H), const_map),
            ],
            out_specs=pl.BlockSpec((TB, R2), batch_map),
        ),
        compiler_params=pltpu.CompilerParams(
            dimension_semantics=("parallel",)),
    )(obs, action,
      prepared["wt_obs"], prepared["wt_act"],
      prepared["w12a"], prepared["w12b"], prepared["slab"])

    # contiguous row-major reshape (no transpose): [q1_0, q2_0, q1_1, q2_1, ...]
    return q12.reshape(B, R, 2)


# ---------------------------------------------------------------------------
# Parameter construction (PyTorch-style) and one-time fusion/packing
# ---------------------------------------------------------------------------
def init_params(key, in_dim, hidden_dim, reward_channels):
    ks = jax.random.split(key, 6)
    scale = 0.02

    def w(k, shape):
        return (scale * jax.random.normal(k, shape)).astype(jnp.float32)

    return {
        "wt":   w(ks[0], (in_dim, hidden_dim)),
        "bt":   jnp.zeros((1, hidden_dim), jnp.float32),
        "ln_g": jnp.ones((1, hidden_dim), jnp.float32),
        "ln_b": jnp.zeros((1, hidden_dim), jnp.float32),
        "w1a":  w(ks[1], (hidden_dim, hidden_dim)),
        "b1a":  jnp.zeros((1, hidden_dim), jnp.float32),
        "w1b":  w(ks[2], (hidden_dim, reward_channels)),
        "b1b":  jnp.zeros((1, reward_channels), jnp.float32),
        "w2a":  w(ks[3], (hidden_dim, hidden_dim)),
        "b2a":  jnp.zeros((1, hidden_dim), jnp.float32),
        "w2b":  w(ks[4], (hidden_dim, reward_channels)),
        "b2b":  jnp.zeros((1, reward_channels), jnp.float32),
    }


def prepare_params(p, obs_dim):
    """One-time (off the hot path) fusion + packing of parameters."""
    H = p["wt"].shape[1]
    R = p["w1b"].shape[1]
    assert 2 * R <= 2 * H and 2 * H >= 128, "slab layout assumes hidden_dim >= 64"

    # split trunk weight so the kernel avoids a wrapper-side concatenate
    wt_obs = p["wt"][:obs_dim]
    wt_act = p["wt"][obs_dim:]

    # fuse both heads' first Linear: (H, 2H)
    w12a = jnp.concatenate([p["w1a"], p["w2a"]], axis=1)
    b12a = jnp.concatenate([p["b1a"], p["b2a"]], axis=1)        # (1, 2H)

    # fuse both heads' second Linear into a block-diagonal, interleaved (2H, 2R)
    w12b = jnp.zeros((2 * H, 2 * R), jnp.float32)
    w12b = w12b.at[:H, 0::2].set(p["w1b"])
    w12b = w12b.at[H:, 1::2].set(p["w2b"])
    b12b = jnp.zeros((2 * R,), jnp.float32)
    b12b = b12b.at[0::2].set(p["b1b"][0])
    b12b = b12b.at[1::2].set(p["b2b"][0])

    # pack all small per-feature vectors into one (8, 2H) slab -> single DMA
    slab = jnp.zeros((8, 2 * H), jnp.float32)
    slab = slab.at[0, :H].set(p["bt"][0])
    slab = slab.at[1, :H].set(p["ln_g"][0])
    slab = slab.at[2, :H].set(p["ln_b"][0])
    slab = slab.at[3, :].set(b12a[0])
    slab = slab.at[4, :2 * R].set(b12b)

    return {"wt_obs": wt_obs, "wt_act": wt_act,
            "w12a": w12a, "w12b": w12b, "slab": slab}


# ---------------------------------------------------------------------------
# Pure-JAX reference (uses the ORIGINAL, unfused params)
# ---------------------------------------------------------------------------
def reference_forward(obs, action, params):
    x = jnp.concatenate([obs, action], axis=-1).astype(jnp.float32)
    h = x @ params["wt"] + params["bt"]
    mean = jnp.mean(h, axis=-1, keepdims=True)
    var = jnp.mean((h - mean) ** 2, axis=-1, keepdims=True)
    h = (h - mean) / jnp.sqrt(var + 1e-5)
    h = jnp.tanh(h * params["ln_g"] + params["ln_b"])
    q1 = jnp.maximum(h @ params["w1a"] + params["b1a"], 0.0) @ params["w1b"] + params["b1b"]
    q2 = jnp.maximum(h @ params["w2a"] + params["b2a"], 0.0) @ params["w2b"] + params["b2b"]
    return jnp.stack([q1, q2], axis=-1)


if __name__ == "__main__":
    # Small shapes consistent with the module's forward (use_sac=False path).
    batch = 8
    obs_dim = 24
    action_dim = 8
    hidden_dim = 128
    skill_channels = 4
    ext_r_dim = 1
    reward_channels = skill_channels + ext_r_dim

    key = jax.random.PRNGKey(0)
    k_obs, k_act, k_params = jax.random.split(key, 3)

    obs = jax.random.normal(k_obs, (batch, obs_dim), jnp.float32)
    action = jax.random.normal(k_act, (batch, action_dim), jnp.float32)
    params = init_params(k_params, obs_dim + action_dim, hidden_dim, reward_channels)
    prepared = prepare_params(params, obs_dim)

    Q = branch_critic_forward(obs, action, prepared)
    Q = jax.block_until_ready(Q)

    assert Q.shape == (batch, reward_channels, 2), Q.shape

    Q_ref = reference_forward(obs, action, params)
    assert jnp.allclose(Q, Q_ref, atol=1e-4, rtol=1e-4), "mismatch vs JAX reference"

    print("KERNEL_OK")
</pallas_src>

<mosaic_0001>
module attributes {stable_mosaic.version = 11 : i64} {
  func.func @branch_critic_kernel(%arg0: i32, %arg1: memref<8x24xf32, #tpu.memory_space<vmem>>, %arg2: memref<8x8xf32, #tpu.memory_space<vmem>>, %arg3: memref<24x128xf32, #tpu.memory_space<vmem>>, %arg4: memref<8x128xf32, #tpu.memory_space<vmem>>, %arg5: memref<128x256xf32, #tpu.memory_space<vmem>>, %arg6: memref<256x10xf32, #tpu.memory_space<vmem>>, %arg7: memref<8x256xf32, #tpu.memory_space<vmem>>, %arg8: memref<8x10xf32, #tpu.memory_space<vmem>>) attributes {dimension_semantics = [#tpu.dimension_semantics<parallel>], iteration_bounds = array<i64: 1>, scalar_prefetch = 0 : i64, scratch_operands = 0 : i64, tpu.core_type = #tpu.core_type<tc>, window_params = [{transform_indices = @transform_0, window_bounds = array<i64: 8, 24>}, {transform_indices = @transform_1, window_bounds = array<i64: 8, 8>}, {pipeline_mode = #tpu.pipeline_mode<synchronous>, transform_indices = @transform_2, window_bounds = array<i64: 24, 128>}, {pipeline_mode = #tpu.pipeline_mode<synchronous>, transform_indices = @transform_3, window_bounds = array<i64: 8, 128>}, {pipeline_mode = #tpu.pipeline_mode<synchronous>, transform_indices = @transform_4, window_bounds = array<i64: 128, 256>}, {pipeline_mode = #tpu.pipeline_mode<synchronous>, transform_indices = @transform_5, window_bounds = array<i64: 256, 10>}, {pipeline_mode = #tpu.pipeline_mode<synchronous>, transform_indices = @transform_6, window_bounds = array<i64: 8, 256>}, {transform_indices = @transform_7, window_bounds = array<i64: 8, 10>}]} {
    %c0 = arith.constant 0 : index
    %c0_0 = arith.constant 0 : index
    %0 = vector.load %arg7[%c0, %c0_0] : memref<8x256xf32, #tpu.memory_space<vmem>>, vector<1x128xf32>
    %c1 = arith.constant 1 : index
    %c0_1 = arith.constant 0 : index
    %1 = vector.load %arg7[%c1, %c0_1] : memref<8x256xf32, #tpu.memory_space<vmem>>, vector<1x128xf32>
    %c2 = arith.constant 2 : index
    %c0_2 = arith.constant 0 : index
    %2 = vector.load %arg7[%c2, %c0_2] : memref<8x256xf32, #tpu.memory_space<vmem>>, vector<1x128xf32>
    %c3 = arith.constant 3 : index
    %c0_3 = arith.constant 0 : index
    %3 = vector.load %arg7[%c3, %c0_3] : memref<8x256xf32, #tpu.memory_space<vmem>>, vector<1x256xf32>
    %c4 = arith.constant 4 : index
    %c0_4 = arith.constant 0 : index
    %4 = vector.load %arg7[%c4, %c0_4] : memref<8x256xf32, #tpu.memory_space<vmem>>, vector<1x10xf32>
    %c0_5 = arith.constant 0 : index
    %c0_6 = arith.constant 0 : index
    %5 = vector.load %arg1[%c0_5, %c0_6] : memref<8x24xf32, #tpu.memory_space<vmem>>, vector<8x24xf32>
    %c0_7 = arith.constant 0 : index
    %c0_8 = arith.constant 0 : index
    %6 = vector.load %arg3[%c0_7, %c0_8] : memref<24x128xf32, #tpu.memory_space<vmem>>, vector<24x128xf32>
    %cst = arith.constant dense<0.000000e+00> : vector<8x128xf32>
    %7 = tpu.matmul %5, %6, %cst {dimension_numbers = #tpu.dot_dimension_numbers<[1], [0], [0], [1], [0, 0, 1, 1], [], []>} : vector<8x24xf32>, vector<24x128xf32>, vector<8x128xf32> -> vector<8x128xf32>
    %c0_9 = arith.constant 0 : index
    %c0_10 = arith.constant 0 : index
    %8 = vector.load %arg2[%c0_9, %c0_10] : memref<8x8xf32, #tpu.memory_space<vmem>>, vector<8x8xf32>
    %c0_11 = arith.constant 0 : index
    %c0_12 = arith.constant 0 : index
    %9 = vector.load %arg4[%c0_11, %c0_12] : memref<8x128xf32, #tpu.memory_space<vmem>>, vector<8x128xf32>
    %cst_13 = arith.constant dense<0.000000e+00> : vector<8x128xf32>
    %10 = tpu.matmul %8, %9, %cst_13 {dimension_numbers = #tpu.dot_dimension_numbers<[1], [0], [0], [1], [0, 0, 1, 1], [], []>} : vector<8x8xf32>, vector<8x128xf32>, vector<8x128xf32> -> vector<8x128xf32>
    %11 = arith.addf %7, %10 : vector<8x128xf32>
    %12 = vector.broadcast %0 : vector<1x128xf32> to vector<8x128xf32>
    %13 = arith.addf %11, %12 : vector<8x128xf32>
    %cst_14 = arith.constant dense<0.000000e+00> : vector<8xf32>
    %14 = vector.multi_reduction <add>, %13, %cst_14 [1] : vector<8x128xf32> to vector<8xf32>
    %15 = vector.shape_cast %14 : vector<8xf32> to vector<8x1xf32>
    %cst_15 = arith.constant 1.280000e+02 : f32
    %16 = vector.broadcast %cst_15 : f32 to vector<8x1xf32>
    %17 = arith.divf %15, %16 : vector<8x1xf32>
    %18 = vector.broadcast %17 : vector<8x1xf32> to vector<8x128xf32>
    %19 = arith.subf %13, %18 : vector<8x128xf32>
    %20 = arith.mulf %19, %19 : vector<8x128xf32>
    %cst_16 = arith.constant dense<0.000000e+00> : vector<8xf32>
    %21 = vector.multi_reduction <add>, %20, %cst_16 [1] : vector<8x128xf32> to vector<8xf32>
    %22 = vector.shape_cast %21 : vector<8xf32> to vector<8x1xf32>
    %cst_17 = arith.constant 1.280000e+02 : f32
    %23 = vector.broadcast %cst_17 : f32 to vector<8x1xf32>
    %24 = arith.divf %22, %23 : vector<8x1xf32>
    %cst_18 = arith.constant 9.99999974E-6 : f32
    %25 = vector.broadcast %cst_18 : f32 to vector<8x1xf32>
    %26 = arith.addf %24, %25 : vector<8x1xf32>
    %27 = math.rsqrt %26 : vector<8x1xf32>
    %28 = vector.broadcast %27 : vector<8x1xf32> to vector<8x128xf32>
    %29 = arith.mulf %19, %28 : vector<8x128xf32>
    %30 = vector.broadcast %1 : vector<1x128xf32> to vector<8x128xf32>
    %31 = arith.mulf %29, %30 : vector<8x128xf32>
    %32 = vector.broadcast %2 : vector<1x128xf32> to vector<8x128xf32>
    %33 = arith.addf %31, %32 : vector<8x128xf32>
    %34 = math.tanh %33 : vector<8x128xf32>
    %c0_19 = arith.constant 0 : index
    %c0_20 = arith.constant 0 : index
    %35 = vector.load %arg5[%c0_19, %c0_20] : memref<128x256xf32, #tpu.memory_space<vmem>>, vector<128x256xf32>
    %cst_21 = arith.constant dense<0.000000e+00> : vector<8x256xf32>
    %36 = tpu.matmul %34, %35, %cst_21 {dimension_numbers = #tpu.dot_dimension_numbers<[1], [0], [0], [1], [0, 0, 1, 1], [], []>} : vector<8x128xf32>, vector<128x256xf32>, vector<8x256xf32> -> vector<8x256xf32>
    %37 = vector.broadcast %3 : vector<1x256xf32> to vector<8x256xf32>
    %38 = arith.addf %36, %37 : vector<8x256xf32>
    %cst_22 = arith.constant 0.000000e+00 : f32
    %39 = vector.broadcast %cst_22 : f32 to vector<8x256xf32>
    %40 = arith.maximumf %38, %39 : vector<8x256xf32>
    %c0_23 = arith.constant 0 : index
    %c0_24 = arith.constant 0 : index
    %41 = vector.load %arg6[%c0_23, %c0_24] : memref<256x10xf32, #tpu.memory_space<vmem>>, vector<256x10xf32>
    %cst_25 = arith.constant dense<0.000000e+00> : vector<8x10xf32>
    %42 = tpu.matmul %40, %41, %cst_25 {dimension_numbers = #tpu.dot_dimension_numbers<[1], [0], [0], [1], [0, 0, 1, 1], [], []>} : vector<8x256xf32>, vector<256x10xf32>, vector<8x10xf32> -> vector<8x10xf32>
    %43 = vector.broadcast %4 : vector<1x10xf32> to vector<8x10xf32>
    %44 = arith.addf %42, %43 : vector<8x10xf32>
    %c0_26 = arith.constant 0 : index
    %c0_27 = arith.constant 0 : index
    %45 = vector.load %arg8[%c0_26, %c0_27] : memref<8x10xf32, #tpu.memory_space<vmem>>, vector<8x10xf32>
    tpu.vector_store %arg8[%c0_26, %c0_27], %44 {strides = array<i32>} : memref<8x10xf32, #tpu.memory_space<vmem>>, vector<8x10xf32>,
    return
  }
  func.func @transform_0(%arg0: i32) -> (i32, i32) {
    %c0_i32 = arith.constant 0 : i32
    %c0_i32_0 = arith.constant 0 : i32
    return %arg0, %c0_i32 : i32, i32
  }
  func.func @transform_1(%arg0: i32) -> (i32, i32) {
    %c0_i32 = arith.constant 0 : i32
    %c0_i32_0 = arith.constant 0 : i32
    return %arg0, %c0_i32 : i32, i32
  }
  func.func @transform_2(%arg0: i32) -> (i32, i32) {
    %c0_i32 = arith.constant 0 : i32
    %c0_i32_0 = arith.constant 0 : i32
    %c0_i32_1 = arith.constant 0 : i32
    return %c0_i32, %c0_i32_0 : i32, i32
  }
  func.func @transform_3(%arg0: i32) -> (i32, i32) {
    %c0_i32 = arith.constant 0 : i32
    %c0_i32_0 = arith.constant 0 : i32
    %c0_i32_1 = arith.constant 0 : i32
    return %c0_i32, %c0_i32_0 : i32, i32
  }
  func.func @transform_4(%arg0: i32) -> (i32, i32) {
    %c0_i32 = arith.constant 0 : i32
    %c0_i32_0 = arith.constant 0 : i32
    %c0_i32_1 = arith.constant 0 : i32
    return %c0_i32, %c0_i32_0 : i32, i32
  }
  func.func @transform_5(%arg0: i32) -> (i32, i32) {
    %c0_i32 = arith.constant 0 : i32
    %c0_i32_0 = arith.constant 0 : i32
    %c0_i32_1 = arith.constant 0 : i32
    return %c0_i32, %c0_i32_0 : i32, i32
  }
  func.func @transform_6(%arg0: i32) -> (i32, i32) {
    %c0_i32 = arith.constant 0 : i32
    %c0_i32_0 = arith.constant 0 : i32
    %c0_i32_1 = arith.constant 0 : i32
    return %c0_i32, %c0_i32_0 : i32, i32
  }
  func.func @transform_7(%arg0: i32) -> (i32, i32) {
    %c0_i32 = arith.constant 0 : i32
    %c0_i32_0 = arith.constant 0 : i32
    return %arg0, %c0_i32 : i32, i32
  }
}

</mosaic_0001>

<llo_original>
// kernel: tpu_custom_call.1
$region0: #{tpu_custom_call.1}
  #allocation0 [shape = 'u32[]', space=smem, size = 0x4, offset = 0x4, fixed_abs, tag = 'smem constant byte address 0x4 - core index']
  #allocation1 [shape = 'u32[144,128]{1,0:T(1,128)}', space=vmem, size = 0x12000, scoped, tag = 'internal scratch']
  %s0 = inlined_call_operand.hbm [shape: f32[8,24], index: 0, kind: input, shape index: {}]
  %s1 = inlined_call_operand.hbm [shape: f32[8,8], index: 1, kind: input, shape index: {}]
  %s2 = inlined_call_operand.vmem [shape: f32[24,128], index: 2, kind: input, shape index: {}]
  %s3 = inlined_call_operand.hbm [shape: f32[8,128], index: 3, kind: input, shape index: {}]
  %s4 = inlined_call_operand.vmem [shape: f32[128,256], index: 4, kind: input, shape index: {}]
  %s5 = inlined_call_operand.vmem [shape: f32[256,10], index: 5, kind: input, shape index: {}]
  %s6 = inlined_call_operand.vmem [shape: f32[8,256], index: 6, kind: input, shape index: {}]
  %s7 = inlined_call_operand.hbm [shape: f32[8,10], index: 7, kind: output, shape index: {}]
  %s8 = sld [smem:[#allocation0]]
  $region50: #{tpu_custom_call.1} parent=0
    _
  %s10 = ssub.s32 1, %s8
  %s11 = scalar_select 0, %s10, %s8
  $region1: #{tpu_custom_call.1} parent=0
    #allocation2 [shape = 'u8[4096]{0}', space=vmem, size = 0x1000, scoped, tag = 'input window, operand 0, single buffered']
    #allocation3 [shape = 's32[1]{0}', space=sflag, size = 0x4, scoped, tag = 'scoped memory for tpu_custom_call.1']
    #allocation4 [shape = 's32[1]{0}', space=sflag, size = 0x4, scoped, tag = 'scoped memory for tpu_custom_call.1']
    #allocation5 [shape = 'u8[4096]{0}', space=vmem, size = 0x1000, scoped, tag = 'input window, operand 1, single buffered']
    #allocation6 [shape = 's32[1]{0}', space=sflag, size = 0x4, scoped, tag = 'scoped memory for tpu_custom_call.1']
    #allocation7 [shape = 'u8[4096]{0}', space=vmem, size = 0x1000, scoped, tag = 'input window, operand 3, single buffered']
    #allocation8 [shape = 'u8[4096]{0}', space=vmem, size = 0x1000, scoped, tag = 'output window, operand 0, single buffered']
    %12 = vsyncpa [#allocation3], 0
    %13 = vsyncpa [#allocation6], 0
    %14 = vsyncpa [#allocation4], 0
    // Predicated region
    $region2: #{tpu_custom_call.1} parent=1 // pred_check
      _
    $region3: #{tpu_custom_call.1} parent=1 // pred_check_branch
      %16 = sbr.rel (0) target = $region5
    $region4: #{tpu_custom_call.1} parent=1 // pred_region
      %s18 = ssub.s32 128, 128
      %19 = vsyncadd [#allocation3], %s18
      %s21 = sshll.u32 [#allocation2], 4
      %s22 = int_to_ptr.vmem [resolvable:$true] %s21
      %24 = dma.hbm_to_vmem [thread:$0]  %s0, 128, %s22, [#allocation3]
    $region5: #{tpu_custom_call.1} parent=1 // pred_fallthru
      _
    // Predicated region
    $region6: #{tpu_custom_call.1} parent=1 // pred_check
      _
    $region7: #{tpu_custom_call.1} parent=1 // pred_check_branch
      %26 = sbr.rel (0) target = $region9
    $region8: #{tpu_custom_call.1} parent=1 // pred_region
      %s28 = ssub.s32 128, 128
      %29 = vsyncadd [#allocation6], %s28
      %s31 = sshll.u32 [#allocation5], 4
      %s32 = int_to_ptr.vmem [resolvable:$true] %s31
      %34 = dma.hbm_to_vmem [thread:$0]  %s1, 128, %s32, [#allocation6]
    $region9: #{tpu_custom_call.1} parent=1 // pred_fallthru
      _
    // Predicated region
    $region10: #{tpu_custom_call.1} parent=1 // pred_check
      _
    $region11: #{tpu_custom_call.1} parent=1 // pred_check_branch
      %36 = sbr.rel (0) target = $region13
    $region12: #{tpu_custom_call.1} parent=1 // pred_region
      _
    $region13: #{tpu_custom_call.1} parent=1 // pred_fallthru
      _
    // Predicated region
    $region14: #{tpu_custom_call.1} parent=1 // pred_check
      _
    $region15: #{tpu_custom_call.1} parent=1 // pred_check_branch
      %38 = sbr.rel (0) target = $region17
    $region16: #{tpu_custom_call.1} parent=1 // pred_region
      %s40 = ssub.s32 128, 128
      %41 = vsyncadd [#allocation6], %s40
      %s43 = sshll.u32 [#allocation7], 4
      %s44 = int_to_ptr.vmem [resolvable:$true] %s43
      %46 = dma.hbm_to_vmem [thread:$0]  %s3, 128, %s44, [#allocation6]
    $region17: #{tpu_custom_call.1} parent=1 // pred_fallthru
      _
    // Predicated region
    $region18: #{tpu_custom_call.1} parent=1 // pred_check
      _
    $region19: #{tpu_custom_call.1} parent=1 // pred_check_branch
      %48 = sbr.rel (0) target = $region21
    $region20: #{tpu_custom_call.1} parent=1 // pred_region
      _
    $region21: #{tpu_custom_call.1} parent=1 // pred_fallthru
      _
    // Predicated region
    $region22: #{tpu_custom_call.1} parent=1 // pred_check
      _
    $region23: #{tpu_custom_call.1} parent=1 // pred_check_branch
      %50 = sbr.rel (0) target = $region25
    $region24: #{tpu_custom_call.1} parent=1 // pred_region
      _
    $region25: #{tpu_custom_call.1} parent=1 // pred_fallthru
      _
    // Predicated region
    $region26: #{tpu_custom_call.1} parent=1 // pred_check
      _
    $region27: #{tpu_custom_call.1} parent=1 // pred_check_branch
      %52 = sbr.rel (0) target = $region29
    $region28: #{tpu_custom_call.1} parent=1 // pred_region
      _
    $region29: #{tpu_custom_call.1} parent=1 // pred_fallthru
      _
    // Predicated region
    $region30: #{tpu_custom_call.1} parent=1 // pred_check
      _
    $region31: #{tpu_custom_call.1} parent=1 // pred_check_branch
      %54 = sbr.rel (0) target = $region33
    $region32: #{tpu_custom_call.1} parent=1 // pred_region
      %55 = dma.done [#allocation3], 128
    $region33: #{tpu_custom_call.1} parent=1 // pred_fallthru
      _
    // Predicated region
    $region34: #{tpu_custom_call.1} parent=1 // pred_check
      _
    $region35: #{tpu_custom_call.1} parent=1 // pred_check_branch
      %57 = sbr.rel (0) target = $region37
    $region36: #{tpu_custom_call.1} parent=1 // pred_region
      %58 = dma.done [#allocation6], 128
    $region37: #{tpu_custom_call.1} parent=1 // pred_fallthru
      _
    // Predicated region
    $region38: #{tpu_custom_call.1} parent=1 // pred_check
      _
    $region39: #{tpu_custom_call.1} parent=1 // pred_check_branch
      %60 = sbr.rel (0) target = $region41
    $region40: #{tpu_custom_call.1} parent=1 // pred_region
      %61 = dma.done [#allocation6], 128
    $region41: #{tpu_custom_call.1} parent=1 // pred_fallthru
      _
    %v62 = vld [vmem:[%s6] ss:$0 sm:$0xff]
    %v63 = vld [vmem:[%s6 + $0x1] ss:$0 sm:$0xff]
    %v64 = vld [vmem:[%s6 + $0x2] ss:$0 sm:$0xff]
    %s65 = scalar_lea.vmem %s6, 3
    %v66 = vld [vmem:[%s65] ss:$8 sm:$0x3]
    %v67 = vld [vmem:[%s6 + $0x4] ss:$0 sm:$0xff]
    %v68 = vld [vmem:[#allocation2] sm:$0xff]
    %v69 = vld [vmem:[%s2] sm:$0xff]
    %v70 = vld [vmem:[%s2 + $0x8] sm:$0xff]
    %v71 = vld [vmem:[%s2 + $0x10] sm:$0xff]
    %v72 = vld [vmem:[#allocation5] sm:$0xff]
    %v73 = vld [vmem:[#allocation7] sm:$0xff]
    %vm74 = vcmask 64512
    %v76 = vsel %vm74, %v72, 0
    %78 = vmatprep.subr.mxu0 0.0
    %79 = vmatpush1.msra.mxu0 %v73
    %80 = vmatprep.subr.mxu0 0.0
    %81 = vmatpush1.msra.mxu0 0.0
    %82 = vmatprep.subr.mxu0 0.0
    %83 = vmatpush1.msra.mxu0 0.0
    %84 = vmatprep.subr.mxu0 0.0
    %85 = vmatpush1.msra.mxu0 0.0
    %86 = vmatprep.subr.mxu0 0.0
    %87 = vmatpush1.msra.mxu0 0.0
    %88 = vmatprep.subr.mxu0 0.0
    %89 = vmatpush1.msra.mxu0 0.0
    %90 = vmatprep.subr.mxu0 0.0
    %91 = vmatpush1.msra.mxu0 0.0
    %92 = vmatprep.subr.mxu0 0.0
    %93 = vmatpush1.msra.mxu0 0.0
    %94 = vmatprep.subr.mxu0 0.0
    %95 = vmatpush1.msra.mxu0 0.0
    %96 = vmatprep.subr.mxu0 0.0
    %97 = vmatpush1.msra.mxu0 0.0
    %98 = vmatprep.subr.mxu0 0.0
    %99 = vmatpush1.msra.mxu0 0.0
    %100 = vmatprep.subr.mxu0 0.0
    %101 = vmatpush1.msra.mxu0 0.0
    %102 = vmatprep.subr.mxu0 0.0
    %103 = vmatpush1.msra.mxu0 0.0
    %104 = vmatprep.subr.mxu0 0.0
    %105 = vmatpush1.msra.mxu0 0.0
    %106 = vmatprep.subr.mxu0 0.0
    %107 = vmatpush1.msra.mxu0 0.0
    %108 = vmatprep.subr.mxu0 0.0
    %109 = vmatpush1.msra.mxu0 0.0
    %110 = vmatprep.subr.mxu0 0.0
    %111 = vmatpush1.msra.mxu0 0.0
    %112 = vmatprep.subr.mxu0 0.0
    %113 = vmatpush1.msra.mxu0 0.0
    %114 = vmatprep.subr.mxu0 0.0
    %115 = vmatpush1.msra.mxu0 0.0
    %116 = vmatprep.subr.mxu0 0.0
    %117 = vmatpush1.msra.mxu0 0.0
    %118 = vmatprep.subr.mxu0 0.0
    %119 = vmatpush1.msra.mxu0 0.0
    %120 = vmatprep.subr.mxu0 0.0
    %121 = vmatpush1.msra.mxu0 0.0
    %122 = vmatprep.subr.mxu0 0.0
    %123 = vmatpush1.msra.mxu0 0.0
    %124 = vmatprep.subr.mxu0 0.0
    %125 = vmatpush1.msra.mxu0 0.0
    %126 = vmatprep.subr.mxu0 0.0
    %127 = vmatpush1.msra.mxu0 0.0
    %128 = vmatprep.subr.mxu0 0.0
    %129 = vmatpush1.msra.mxu0 0.0
    %130 = vmatprep.subr.mxu0 0.0
    %131 = vmatpush1.msra.mxu0 0.0
    %132 = vmatprep.subr.mxu0 0.0
    %133 = vmatpush1.msra.mxu0 0.0
    %134 = vmatprep.subr.mxu0 0.0
    %135 = vmatpush1.msra.mxu0 0.0
    %136 = vmatprep.subr.mxu0 0.0
    %137 = vmatpush1.msra.mxu0 0.0
    %138 = vmatprep.subr.mxu0 0.0
    %139 = vmatpush1.msra.mxu0 0.0
    %140 = vmatprep.subr.mxu0 0.0
    %141 = vmatpush1.msra.mxu0 0.0
    %142 = vmatprep.mubr.f32.mxu0 0.0
    %143 = vmatmul.mubr.f32.gmra.mrb[0].mxu0 %v76
    %v144 = vpop.f32.mrb[0].mxu0
    %v145 = vadd.f32 0.0, %v144
    %v146 = vpop.f32.mrb[0].mxu0
    %147 = vdwg.mxu0
    %vm148 = vcmask 195584
    %v150 = vsel %vm148, %v68, 0
    %152 = vmatprep.subr.mxu0 0.0
    %153 = vmatpush1.msra.mxu0 %v69
    %154 = vmatprep.subr.mxu0 0.0
    %155 = vmatpush1.msra.mxu0 %v70
    %156 = vmatprep.subr.mxu0 0.0
    %157 = vmatpush1.msra.mxu0 %v71
    %158 = vmatprep.subr.mxu0 0.0
    %159 = vmatpush1.msra.mxu0 0.0
    %160 = vmatprep.subr.mxu0 0.0
    %161 = vmatpush1.msra.mxu0 0.0
    %162 = vmatprep.subr.mxu0 0.0
    %163 = vmatpush1.msra.mxu0 0.0
    %164 = vmatprep.subr.mxu0 0.0
    %165 = vmatpush1.msra.mxu0 0.0
    %166 = vmatprep.subr.mxu0 0.0
    %167 = vmatpush1.msra.mxu0 0.0
    %168 = vmatprep.subr.mxu0 0.0
    %169 = vmatpush1.msra.mxu0 0.0
    %170 = vmatprep.subr.mxu0 0.0
    %171 = vmatpush1.msra.mxu0 0.0
    %172 = vmatprep.subr.mxu0 0.0
    %173 = vmatpush1.msra.mxu0 0.0
    %174 = vmatprep.subr.mxu0 0.0
    %175 = vmatpush1.msra.mxu0 0.0
    %176 = vmatprep.subr.mxu0 0.0
    %177 = vmatpush1.msra.mxu0 0.0
    %178 = vmatprep.subr.mxu0 0.0
    %179 = vmatpush1.msra.mxu0 0.0
    %180 = vmatprep.subr.mxu0 0.0
    %181 = vmatpush1.msra.mxu0 0.0
    %182 = vmatprep.subr.mxu0 0.0
    %183 = vmatpush1.msra.mxu0 0.0
    %184 = vmatprep.subr.mxu0 0.0
    %185 = vmatpush1.msra.mxu0 0.0
    %186 = vmatprep.subr.mxu0 0.0
    %187 = vmatpush1.msra.mxu0 0.0
    %188 = vmatprep.subr.mxu0 0.0
    %189 = vmatpush1.msra.mxu0 0.0
    %190 = vmatprep.subr.mxu0 0.0
    %191 = vmatpush1.msra.mxu0 0.0
    %192 = vmatprep.subr.mxu0 0.0
    %193 = vmatpush1.msra.mxu0 0.0
    %194 = vmatprep.subr.mxu0 0.0
    %195 = vmatpush1.msra.mxu0 0.0
    %196 = vmatprep.subr.mxu0 0.0
    %197 = vmatpush1.msra.mxu0 0.0
    %198 = vmatprep.subr.mxu0 0.0
    %199 = vmatpush1.msra.mxu0 0.0
    %200 = vmatprep.subr.mxu0 0.0
    %201 = vmatpush1.msra.mxu0 0.0
    %202 = vmatprep.subr.mxu0 0.0
    %203 = vmatpush1.msra.mxu0 0.0
    %204 = vmatprep.subr.mxu0 0.0
    %205 = vmatpush1.msra.mxu0 0.0
    %206 = vmatprep.subr.mxu0 0.0
    %207 = vmatpush1.msra.mxu0 0.0
    %208 = vmatprep.subr.mxu0 0.0
    %209 = vmatpush1.msra.mxu0 0.0
    %210 = vmatprep.subr.mxu0 0.0
    %211 = vmatpush1.msra.mxu0 0.0
    %212 = vmatprep.subr.mxu0 0.0
    %213 = vmatpush1.msra.mxu0 0.0
    %214 = vmatprep.subr.mxu0 0.0
    %215 = vmatpush1.msra.mxu0 0.0
    %216 = vmatprep.mubr.f32.mxu0 0.0
    %217 = vmatmul.mubr.f32.gmra.mrb[0].mxu0 %v150
    %v218 = vpop.f32.mrb[0].mxu0
    %v219 = vadd.f32 %v145, %v218
    %v220 = vpop.f32.mrb[0].mxu0
    %221 = vdwg.mxu0
    %v222 = vadd.f32 %v219, %v62
    %223 = vadd.xlane.f32.xlu0 %v222
    %v224 = vpop.xlane.xlu0 %223
    %v225 = vrcp.pop 128.0
    %v226 = vmul.f32 %v224, %v225
    %v227 = vsub.f32 %v222, %v226
    %v228 = vmul.f32 %v227, %v227
    %229 = vadd.xlane.f32.xlu0 %v228
    %v230 = vpop.xlane.xlu0 %229
    %v231 = vmul.f32 %v230, %v225
    %v232 = vadd.f32 %v231, 1e-05
    %v233 = vrsqrt.pop %v232
    %v234 = vmul.f32 %v227, %v233
    %v235 = vmul.f32 %v234, %v63
    %v236 = vadd.f32 %v235, %v64
    %v237 = vtanh.pop %v236
    %v238 = vld [vmem:[%s4] sm:$0xff]
    %v239 = vld [vmem:[%s4 + $0x8] sm:$0xff]
    %v240 = vld [vmem:[%s4 + $0x10] sm:$0xff]
    %v241 = vld [vmem:[%s4 + $0x18] sm:$0xff]
    %v242 = vld [vmem:[%s4 + $0x20] sm:$0xff]
    %v243 = vld [vmem:[%s4 + $0x28] sm:$0xff]
    %v244 = vld [vmem:[%s4 + $0x30] sm:$0xff]
    %v245 = vld [vmem:[%s4 + $0x38] sm:$0xff]
    %v246 = vld [vmem:[%s4 + $0x40] sm:$0xff]
    %v247 = vld [vmem:[%s4 + $0x48] sm:$0xff]
    %v248 = vld [vmem:[%s4 + $0x50] sm:$0xff]
    %v249 = vld [vmem:[%s4 + $0x58] sm:$0xff]
    %v250 = vld [vmem:[%s4 + $0x60] sm:$0xff]
    %v251 = vld [vmem:[%s4 + $0x68] sm:$0xff]
    %v252 = vld [vmem:[%s4 + $0x70] sm:$0xff]
    %v253 = vld [vmem:[%s4 + $0x78] sm:$0xff]
    %v254 = vld [vmem:[%s4 + $0x80] sm:$0xff]
    %v255 = vld [vmem:[%s4 + $0x88] sm:$0xff]
    %v256 = vld [vmem:[%s4 + $0x90] sm:$0xff]
    %v257 = vld [vmem:[%s4 + $0x98] sm:$0xff]
    %v258 = vld [vmem:[%s4 + $0xa0] sm:$0xff]
    %v259 = vld [vmem:[%s4 + $0xa8] sm:$0xff]
    %v260 = vld [vmem:[%s4 + $0xb0] sm:$0xff]
    %v261 = vld [vmem:[%s4 + $0xb8] sm:$0xff]
    %v262 = vld [vmem:[%s4 + $0xc0] sm:$0xff]
    %v263 = vld [vmem:[%s4 + $0xc8] sm:$0xff]
    %v264 = vld [vmem:[%s4 + $0xd0] sm:$0xff]
    %v265 = vld [vmem:[%s4 + $0xd8] sm:$0xff]
    %v266 = vld [vmem:[%s4 + $0xe0] sm:$0xff]
    %v267 = vld [vmem:[%s4 + $0xe8] sm:$0xff]
    %v268 = vld [vmem:[%s4 + $0xf0] sm:$0xff]
    %v269 = vld [vmem:[%s4 + $0xf8] sm:$0xff]
    %v271 = vlaneseq
    %v272 = vshrl.u32 %v271, 7
    %v273 = vsub.s32 0, %v272
    %v274 = vrot.slane %v66, %v273
    %v275 = vlaneseq
    %v276 = vshrl.u32 %v275, 7
    %v277 = vsub.s32 1, %v276
    %v278 = vrot.slane %v66, %v277
    %281 = vmatprep.subr.mxu0 %v239
    %282 = vmatpush1.msra.mxu0 %v238
    %283 = vmatprep.subr.mxu0 %v241
    %284 = vmatpush1.msra.mxu0 %v240
    %285 = vmatprep.subr.mxu0 %v243
    %286 = vmatpush1.msra.mxu0 %v242
    %287 = vmatprep.subr.mxu0 %v245
    %288 = vmatpush1.msra.mxu0 %v244
    %289 = vmatprep.subr.mxu0 %v247
    %290 = vmatpush1.msra.mxu0 %v246
    %291 = vmatprep.subr.mxu0 %v249
    %292 = vmatpush1.msra.mxu0 %v248
    %293 = vmatprep.subr.mxu0 %v251
    %294 = vmatpush1.msra.mxu0 %v250
    %295 = vmatprep.subr.mxu0 %v253
    %296 = vmatpush1.msra.mxu0 %v252
    %297 = vmatprep.subr.mxu0 %v255
    %298 = vmatpush1.msra.mxu0 %v254
    %299 = vmatprep.subr.mxu0 %v257
    %300 = vmatpush1.msra.mxu0 %v256
    %301 = vmatprep.subr.mxu0 %v259
    %302 = vmatpush1.msra.mxu0 %v258
    %303 = vmatprep.subr.mxu0 %v261
    %304 = vmatpush1.msra.mxu0 %v260
    %305 = vmatprep.subr.mxu0 %v263
    %306 = vmatpush1.msra.mxu0 %v262
    %307 = vmatprep.subr.mxu0 %v265
    %308 = vmatpush1.msra.mxu0 %v264
    %309 = vmatprep.subr.mxu0 %v267
    %310 = vmatpush1.msra.mxu0 %v266
    %311 = vmatprep.subr.mxu0 %v269
    %312 = vmatpush1.msra.mxu0 %v268
    %313 = vmatprep.subr.mxu0 0.0
    %314 = vmatpush1.msra.mxu0 0.0
    %315 = vmatprep.subr.mxu0 0.0
    %316 = vmatpush1.msra.mxu0 0.0
    %317 = vmatprep.subr.mxu0 0.0
    %318 = vmatpush1.msra.mxu0 0.0
    %319 = vmatprep.subr.mxu0 0.0
    %320 = vmatpush1.msra.mxu0 0.0
    %321 = vmatprep.subr.mxu0 0.0
    %322 = vmatpush1.msra.mxu0 0.0
    %323 = vmatprep.subr.mxu0 0.0
    %324 = vmatpush1.msra.mxu0 0.0
    %325 = vmatprep.subr.mxu0 0.0
    %326 = vmatpush1.msra.mxu0 0.0
    %327 = vmatprep.subr.mxu0 0.0
    %328 = vmatpush1.msra.mxu0 0.0
    %329 = vmatprep.subr.mxu0 0.0
    %330 = vmatpush1.msra.mxu0 0.0
    %331 = vmatprep.subr.mxu0 0.0
    %332 = vmatpush1.msra.mxu0 0.0
    %333 = vmatprep.subr.mxu0 0.0
    %334 = vmatpush1.msra.mxu0 0.0
    %335 = vmatprep.subr.mxu0 0.0
    %336 = vmatpush1.msra.mxu0 0.0
    %337 = vmatprep.subr.mxu0 0.0
    %338 = vmatpush1.msra.mxu0 0.0
    %339 = vmatprep.subr.mxu0 0.0
    %340 = vmatpush1.msra.mxu0 0.0
    %341 = vmatprep.subr.mxu0 0.0
    %342 = vmatpush1.msra.mxu0 0.0
    %343 = vmatprep.subr.mxu0 0.0
    %344 = vmatpush1.msra.mxu0 0.0
    %345 = vmatprep.mubr.f32.mxu0 0.0
    %346 = vmatmul.mubr.f32.gmra.mrb[0].mxu0 %v237
    %v347 = vpop.f32.mrb[0].mxu0
    %v348 = vadd.f32 %v274, %v347
    %v349 = vpop.f32.mrb[0].mxu0
    %v350 = vadd.f32 %v278, %v349
    %351 = vdwg.mxu0
    %v352 = vmax.f32 %v348, 0.0
    %v353 = vmax.f32 %v350, 0.0
    %v354 = vld [vmem:[%s5] sm:$0xff]
    %v355 = vld [vmem:[%s5 + $0x8] sm:$0xff]
    %v356 = vld [vmem:[%s5 + $0x10] sm:$0xff]
    %v357 = vld [vmem:[%s5 + $0x18] sm:$0xff]
    %v358 = vld [vmem:[%s5 + $0x20] sm:$0xff]
    %v359 = vld [vmem:[%s5 + $0x28] sm:$0xff]
    %v360 = vld [vmem:[%s5 + $0x30] sm:$0xff]
    %v361 = vld [vmem:[%s5 + $0x38] sm:$0xff]
    %v362 = vld [vmem:[%s5 + $0x40] sm:$0xff]
    %v363 = vld [vmem:[%s5 + $0x48] sm:$0xff]
    %v364 = vld [vmem:[%s5 + $0x50] sm:$0xff]
    %v365 = vld [vmem:[%s5 + $0x58] sm:$0xff]
    %v366 = vld [vmem:[%s5 + $0x60] sm:$0xff]
    %v367 = vld [vmem:[%s5 + $0x68] sm:$0xff]
    %v368 = vld [vmem:[%s5 + $0x70] sm:$0xff]
    %v369 = vld [vmem:[%s5 + $0x78] sm:$0xff]
    %v370 = vld [vmem:[%s5 + $0x80] sm:$0xff]
    %v371 = vld [vmem:[%s5 + $0x88] sm:$0xff]
    %v372 = vld [vmem:[%s5 + $0x90] sm:$0xff]
    %v373 = vld [vmem:[%s5 + $0x98] sm:$0xff]
    %v374 = vld [vmem:[%s5 + $0xa0] sm:$0xff]
    %v375 = vld [vmem:[%s5 + $0xa8] sm:$0xff]
    %v376 = vld [vmem:[%s5 + $0xb0] sm:$0xff]
    %v377 = vld [vmem:[%s5 + $0xb8] sm:$0xff]
    %v378 = vld [vmem:[%s5 + $0xc0] sm:$0xff]
    %v379 = vld [vmem:[%s5 + $0xc8] sm:$0xff]
    %v380 = vld [vmem:[%s5 + $0xd0] sm:$0xff]
    %v381 = vld [vmem:[%s5 + $0xd8] sm:$0xff]
    %v382 = vld [vmem:[%s5 + $0xe0] sm:$0xff]
    %v383 = vld [vmem:[%s5 + $0xe8] sm:$0xff]
    %v384 = vld [vmem:[%s5 + $0xf0] sm:$0xff]
    %v385 = vld [vmem:[%s5 + $0xf8] sm:$0xff]
    %386 = vmatprep.subr.mxu0 0.0
    %387 = vmatpush1.msra.mxu0 %v354
    %388 = vmatprep.subr.mxu0 0.0
    %389 = vmatpush1.msra.mxu0 %v355
    %390 = vmatprep.subr.mxu0 0.0
    %391 = vmatpush1.msra.mxu0 %v356
    %392 = vmatprep.subr.mxu0 0.0
    %393 = vmatpush1.msra.mxu0 %v357
    %394 = vmatprep.subr.mxu0 0.0
    %395 = vmatpush1.msra.mxu0 %v358
    %396 = vmatprep.subr.mxu0 0.0
    %397 = vmatpush1.msra.mxu0 %v359
    %398 = vmatprep.subr.mxu0 0.0
    %399 = vmatpush1.msra.mxu0 %v360
    %400 = vmatprep.subr.mxu0 0.0
    %401 = vmatpush1.msra.mxu0 %v361
    %402 = vmatprep.subr.mxu0 0.0
    %403 = vmatpush1.msra.mxu0 %v362
    %404 = vmatprep.subr.mxu0 0.0
    %405 = vmatpush1.msra.mxu0 %v363
    %406 = vmatprep.subr.mxu0 0.0
    %407 = vmatpush1.msra.mxu0 %v364
    %408 = vmatprep.subr.mxu0 0.0
    %409 = vmatpush1.msra.mxu0 %v365
    %410 = vmatprep.subr.mxu0 0.0
    %411 = vmatpush1.msra.mxu0 %v366
    %412 = vmatprep.subr.mxu0 0.0
    %413 = vmatpush1.msra.mxu0 %v367
    %414 = vmatprep.subr.mxu0 0.0
    %415 = vmatpush1.msra.mxu0 %v368
    %416 = vmatprep.subr.mxu0 0.0
    %417 = vmatpush1.msra.mxu0 %v369
    %418 = vmatprep.subr.mxu0 0.0
    %419 = vmatpush1.msra.mxu0 %v370
    %420 = vmatprep.subr.mxu0 0.0
    %421 = vmatpush1.msra.mxu0 %v371
    %422 = vmatprep.subr.mxu0 0.0
    %423 = vmatpush1.msra.mxu0 %v372
    %424 = vmatprep.subr.mxu0 0.0
    %425 = vmatpush1.msra.mxu0 %v373
    %426 = vmatprep.subr.mxu0 0.0
    %427 = vmatpush1.msra.mxu0 %v374
    %428 = vmatprep.subr.mxu0 0.0
    %429 = vmatpush1.msra.mxu0 %v375
    %430 = vmatprep.subr.mxu0 0.0
    %431 = vmatpush1.msra.mxu0 %v376
    %432 = vmatprep.subr.mxu0 0.0
    %433 = vmatpush1.msra.mxu0 %v377
    %434 = vmatprep.subr.mxu0 0.0
    %435 = vmatpush1.msra.mxu0 %v378
    %436 = vmatprep.subr.mxu0 0.0
    %437 = vmatpush1.msra.mxu0 %v379
    %438 = vmatprep.subr.mxu0 0.0
    %439 = vmatpush1.msra.mxu0 %v380
    %440 = vmatprep.subr.mxu0 0.0
    %441 = vmatpush1.msra.mxu0 %v381
    %442 = vmatprep.subr.mxu0 0.0
    %443 = vmatpush1.msra.mxu0 %v382
    %444 = vmatprep.subr.mxu0 0.0
    %445 = vmatpush1.msra.mxu0 %v383
    %446 = vmatprep.subr.mxu0 0.0
    %447 = vmatpush1.msra.mxu0 %v384
    %448 = vmatprep.subr.mxu0 0.0
    %449 = vmatpush1.msra.mxu0 %v385
    %450 = vmatprep.mubr.f32.mxu0 %v353
    %451 = vmatmul.mubr.f32.gmra.mrb[0].mxu0 %v352
    %v452 = vpop.f32.mrb[0].mxu0
    %v453 = vadd.f32 %v67, %v452
    %v454 = vpop.f32.mrb[0].mxu0
    %455 = vdwg.mxu0
    %vm456 = vcmask 80896
    %457 = vst.msk [vmem:[#allocation8] sm:$0xff] %vm456, %v453
    // Predicated region
    $region42: #{tpu_custom_call.1} parent=1 // pred_check
      _
    $region43: #{tpu_custom_call.1} parent=1 // pred_check_branch
      %459 = sbr.rel (0) target = $region45
    $region44: #{tpu_custom_call.1} parent=1 // pred_region
      %s461 = ssub.s32 128, 128
      %462 = vsyncadd [#allocation4], %s461
      %s464 = sshll.u32 [#allocation8], 4
      %s465 = int_to_ptr.vmem [resolvable:$true] %s464
      %467 = dma.vmem_to_hbm [thread:$0]  %s465, 128, %s7, [#allocation4]
    $region45: #{tpu_custom_call.1} parent=1 // pred_fallthru
      _
    // Predicated region
    $region46: #{tpu_custom_call.1} parent=1 // pred_check
      _
    $region47: #{tpu_custom_call.1} parent=1 // pred_check_branch
      %469 = sbr.rel (0) target = $region49
    $region48: #{tpu_custom_call.1} parent=1 // pred_region
      %470 = dma.done [#allocation4], 128
    $region49: #{tpu_custom_call.1} parent=1 // pred_fallthru
      _
    %471 = vsyncpa [#allocation3], 1
    %472 = vsyncpa [#allocation6], 1
    %473 = vsyncpa [#allocation4], 1

</llo_original>
